<compile_context>
chip_gen: v5e
topology: v5e:2x2
jax: 0.10.0
libtpu: 0.0.40
codegen_flags: <defaults>
</compile_context>

<pallas_src>
import math

import jax
import jax.numpy as jnp
from jax.experimental import pallas as pl
from jax.experimental.pallas import tpu as pltpu


def _vmem_limit_bytes():
    """Explicit VMEM budget (default scoped limit is only 16-32 MiB)."""
    try:
        cap = int(pltpu.get_tpu_info().vmem_capacity_bytes)
        return cap * 7 // 8                # leave headroom for the compiler
    except Exception:
        return 56 * 1024 * 1024            # safe on every gen (v7x: 64 MiB/TC)


def _choose_vocab_tile(vocab, target):
    """Largest multiple of 128 that divides `vocab` and is <= target, else vocab."""
    if vocab <= target:
        return vocab
    t = (target // 128) * 128
    while t >= 128:
        if vocab % t == 0:
            return t
        t -= 128
    return vocab


def _proj_logsoftmax_kernel(x_ref, wt_ref, b_ref, out_ref, m_sc, s_sc):
    # x_ref : (tm, d_model) f32   row tile, resident across the vocab axis
    # wt_ref: (d_model, tv) bf16  streamed vocab tile of W^T
    # b_ref : (1, tv)       f32   streamed vocab tile of the bias
    # out   : (tm, vocab)         row-resident output block (also logits scratch)
    # m_sc/s_sc: (tm, 1) f32      running max / sum-exp (online logsumexp)
    j = pl.program_id(1)
    tv = wt_ref.shape[1]

    @pl.when(j == 0)
    def _init():
        m_sc[...] = jnp.full_like(m_sc, -jnp.inf)
        s_sc[...] = jnp.zeros_like(s_sc)

    # In-kernel bf16 cast of the activation tile (VPU); f32 MXU accumulation.
    x_bf = x_ref[...].astype(jnp.bfloat16)
    logits = jnp.dot(x_bf, wt_ref[...], preferred_element_type=jnp.float32)
    logits = logits + b_ref[...]

    # Online logsumexp over vocab tiles (exp/log use the EUP slot).
    m_prev = m_sc[...]
    m_new = jnp.maximum(m_prev, jnp.max(logits, axis=-1, keepdims=True))
    s_sc[...] = (s_sc[...] * jnp.exp(m_prev - m_new)
                 + jnp.sum(jnp.exp(logits - m_new), axis=-1, keepdims=True))
    m_sc[...] = m_new

    # Stash raw logits directly into the resident output block; the column
    # offset is a multiple of 128 (tv is 128-aligned or the full vocab), so
    # this is a lane-aligned store and no extra (tm, vocab) temporary exists.
    col = pl.multiple_of(j * tv, 128)
    out_ref[:, pl.ds(col, tv)] = logits.astype(out_ref.dtype)

    # Last vocab tile: fix up the whole row in place: out <- logits - lse.
    @pl.when(j == pl.num_programs(1) - 1)
    def _finalize():
        lse = m_sc[...] + jnp.log(s_sc[...])
        out_ref[...] = (out_ref[...].astype(jnp.float32) - lse).astype(out_ref.dtype)


def prepare_projection_params(w, b):
    """One-time (init-time) weight prep: W^T in bf16, bias as an f32 row.

    torch nn.Linear stores w as (vocab, d_model); the transpose + casts are
    hoisted here so they are not re-executed on every forward call.
    """
    wt_bf16 = jnp.asarray(w).T.astype(jnp.bfloat16)             # (d_model, vocab)
    b_row = jnp.asarray(b).astype(jnp.float32).reshape(1, -1)   # (1, vocab)
    return wt_bf16, b_row


def projection_layer_apply(x, wt_bf16, b_row, *, block_rows=256,
                           block_vocab=2048, out_dtype=jnp.float32):
    """log_softmax(x @ W^T + b, axis=-1) with pre-prepared (W^T, bias) params."""
    *lead, d_model = x.shape
    d_in, vocab = wt_bf16.shape
    assert d_in == d_model, "weight in_features must match x last dim"
    assert b_row.shape == (1, vocab)

    x2 = x.reshape(-1, d_model).astype(jnp.float32)
    m_rows = x2.shape[0]

    # Vocab tile: multiple of 128 (lane-dense stores) that divides vocab.
    tv = _choose_vocab_tile(vocab, block_vocab)
    n_vocab_tiles = vocab // tv

    # Row tile: fill the 256-wide MXU when possible, clamped so the
    # double-buffered (tm, vocab) output blocks + streamed tiles fit VMEM.
    vmem_budget = _vmem_limit_bytes()
    out_isz = jnp.dtype(out_dtype).itemsize
    stream_bytes = (2 * d_model * tv * 2            # W^T tiles, double-buffered
                    + 2 * block_rows * d_model * 4  # x tiles, double-buffered
                    + (4 << 20))                    # slack: bias, scratch, etc.
    avail = max(vmem_budget - stream_bytes, 4 << 20)
    max_tm = max(8, (avail // (2 * vocab * out_isz)) // 8 * 8)

    tm = min(block_rows, max_tm)
    if tm < m_rows and tm % 8 != 0:
        tm = max(8, (tm // 8) * 8)
    tm = min(tm, m_rows)
    n_row_tiles = pl.cdiv(m_rows, tm)

    grid_spec = pltpu.PrefetchScalarGridSpec(
        num_scalar_prefetch=0,
        grid=(n_row_tiles, n_vocab_tiles),
        in_specs=[
            pl.BlockSpec((tm, d_model), lambda i, j: (i, 0)),   # x row tile
            pl.BlockSpec((d_model, tv), lambda i, j: (0, j)),   # W^T vocab tile
            pl.BlockSpec((1, tv), lambda i, j: (0, j)),         # bias vocab tile
        ],
        out_specs=pl.BlockSpec((tm, vocab), lambda i, j: (i, 0)),
        scratch_shapes=[
            pltpu.VMEM((tm, 1), jnp.float32),   # running max
            pltpu.VMEM((tm, 1), jnp.float32),   # running sum-exp
        ],
    )

    cost = pl.CostEstimate(
        flops=2 * m_rows * d_model * vocab,
        transcendentals=m_rows * vocab,
        bytes_accessed=(m_rows * d_model * 4 + d_model * vocab * 2
                        + vocab * 4 + m_rows * vocab * out_isz),
    )

    out = pl.pallas_call(
        _proj_logsoftmax_kernel,
        out_shape=jax.ShapeDtypeStruct((m_rows, vocab), out_dtype),
        grid_spec=grid_spec,
        compiler_params=pltpu.CompilerParams(
            dimension_semantics=("parallel", "arbitrary"),
            vmem_limit_bytes=vmem_budget,
        ),
        cost_estimate=cost,
    )(x2, wt_bf16, b_row)

    return out.reshape(*lead, vocab)


def projection_layer(x, w, b, **kwargs):
    """Convenience wrapper matching the torch module signature."""
    wt_bf16, b_row = prepare_projection_params(w, b)
    return projection_layer_apply(x, wt_bf16, b_row, **kwargs)


def _reference_f32(x, w, b):
    return jax.nn.log_softmax(x @ w.T + b, axis=-1)


def _reference_matched(x, w, b):
    # Same precision recipe as the kernel: bf16 operands, f32 accumulation.
    logits = jnp.dot(x.astype(jnp.bfloat16), w.T.astype(jnp.bfloat16),
                     preferred_element_type=jnp.float32) + b.astype(jnp.float32)
    return jax.nn.log_softmax(logits, axis=-1)


if __name__ == "__main__":
    # --- test 1: single vocab tile (degenerate path), shapes from the module --
    B, S, D_MODEL, VOCAB = 2, 8, 32, 128

    key = jax.random.PRNGKey(0)
    kx, kw, kb = jax.random.split(key, 3)

    x = jax.random.normal(kx, (B, S, D_MODEL), dtype=jnp.float32)
    bound = 1.0 / math.sqrt(D_MODEL)     # torch nn.Linear-style uniform init
    w = jax.random.uniform(kw, (VOCAB, D_MODEL), minval=-bound, maxval=bound,
                           dtype=jnp.float32)
    b = jax.random.uniform(kb, (VOCAB,), minval=-bound, maxval=bound,
                           dtype=jnp.float32)

    params = prepare_projection_params(w, b)   # once, at init time
    out = projection_layer_apply(x, *params)
    out = jax.block_until_ready(out)
    assert out.shape == (B, S, VOCAB)

    ref_matched = _reference_matched(x, w, b)
    ref_f32 = _reference_f32(x, w, b)
    assert jnp.allclose(out, ref_matched, atol=2e-3, rtol=2e-3), (
        f"matched-ref max abs err {jnp.max(jnp.abs(out - ref_matched))}")
    assert jnp.allclose(out, ref_f32, atol=3e-2, rtol=3e-2), (
        f"f32-ref max abs err {jnp.max(jnp.abs(out - ref_f32))}")
    assert jnp.allclose(jnp.sum(jnp.exp(out), axis=-1), 1.0, atol=1e-4)

    # --- test 2: multi row-tile + multi vocab-tile (online logsumexp path) ---
    B2, S2, D2, V2 = 4, 8, 32, 256
    kx2, kw2, kb2 = jax.random.split(jax.random.PRNGKey(1), 3)
    x2 = jax.random.normal(kx2, (B2, S2, D2), dtype=jnp.float32)
    bound2 = 1.0 / math.sqrt(D2)
    w2 = jax.random.uniform(kw2, (V2, D2), minval=-bound2, maxval=bound2,
                            dtype=jnp.float32)
    b2 = jax.random.uniform(kb2, (V2,), minval=-bound2, maxval=bound2,
                            dtype=jnp.float32)

    out2 = projection_layer(x2, w2, b2, block_rows=8, block_vocab=128)
    out2 = jax.block_until_ready(out2)
    assert out2.shape == (B2, S2, V2)
    ref2 = _reference_matched(x2, w2, b2)
    assert jnp.allclose(out2, ref2, atol=2e-3, rtol=2e-3), (
        f"tiled-path max abs err {jnp.max(jnp.abs(out2 - ref2))}")
    assert jnp.allclose(jnp.sum(jnp.exp(out2), axis=-1), 1.0, atol=1e-4)

    print("KERNEL_OK")
</pallas_src>

<mosaic_0001>
module attributes {stable_mosaic.version = 11 : i64} {
  func.func @_proj_logsoftmax_kernel(%arg0: i32, %arg1: i32, %arg2: memref<16x32xf32, #tpu.memory_space<vmem>>, %arg3: memref<32x128xbf16, #tpu.memory_space<vmem>>, %arg4: memref<1x128xf32, #tpu.memory_space<vmem>>, %arg5: memref<16x128xf32, #tpu.memory_space<vmem>>, %arg6: memref<16x1xf32, #tpu.memory_space<vmem>>, %arg7: memref<16x1xf32, #tpu.memory_space<vmem>>) attributes {dimension_semantics = [#tpu.dimension_semantics<parallel>, #tpu.dimension_semantics<arbitrary>], iteration_bounds = array<i64: 1, 1>, scalar_prefetch = 0 : i64, scratch_operands = 2 : i64, tpu.core_type = #tpu.core_type<tc>, window_params = [{transform_indices = @transform_0, window_bounds = array<i64: 16, 32>}, {transform_indices = @transform_1, window_bounds = array<i64: 32, 128>}, {transform_indices = @transform_2, window_bounds = array<i64: 1, 128>}, {transform_indices = @transform_3, window_bounds = array<i64: 16, 128>}]} {
    %c0_i32 = arith.constant 0 : i32
    %0 = arith.cmpi eq, %arg1, %c0_i32 : i32
    %1 = arith.extui %0 : i1 to i32
    %c0_i32_0 = arith.constant 0 : i32
    %2 = arith.cmpi ne, %1, %c0_i32_0 : i32
    scf.if %2 {
      %cst_19 = arith.constant 0xFF800000 : f32
      %33 = vector.broadcast %cst_19 : f32 to vector<16x1xf32>
      %c0_20 = arith.constant 0 : index
      %c0_21 = arith.constant 0 : index
      %34 = vector.load %arg6[%c0_20, %c0_21] : memref<16x1xf32, #tpu.memory_space<vmem>>, vector<16x1xf32>
      tpu.vector_store %arg6[%c0_20, %c0_21], %33 {strides = array<i32>} : memref<16x1xf32, #tpu.memory_space<vmem>>, vector<16x1xf32>,
      %cst_22 = arith.constant 0.000000e+00 : f32
      %35 = vector.broadcast %cst_22 : f32 to vector<16x1xf32>
      %c0_23 = arith.constant 0 : index
      %c0_24 = arith.constant 0 : index
      %36 = vector.load %arg7[%c0_23, %c0_24] : memref<16x1xf32, #tpu.memory_space<vmem>>, vector<16x1xf32>
      tpu.vector_store %arg7[%c0_23, %c0_24], %35 {strides = array<i32>} : memref<16x1xf32, #tpu.memory_space<vmem>>, vector<16x1xf32>,
    } else {
    }
    %c0 = arith.constant 0 : index
    %c0_1 = arith.constant 0 : index
    %3 = vector.load %arg2[%c0, %c0_1] : memref<16x32xf32, #tpu.memory_space<vmem>>, vector<16x32xf32>
    %4 = arith.truncf %3 : vector<16x32xf32> to vector<16x32xbf16>
    %c0_2 = arith.constant 0 : index
    %c0_3 = arith.constant 0 : index
    %5 = vector.load %arg3[%c0_2, %c0_3] : memref<32x128xbf16, #tpu.memory_space<vmem>>, vector<32x128xbf16>
    %cst = arith.constant dense<0.000000e+00> : vector<16x128xf32>
    %6 = tpu.matmul %4, %5, %cst {dimension_numbers = #tpu.dot_dimension_numbers<[1], [0], [0], [1], [0, 0, 1, 1], [], []>} : vector<16x32xbf16>, vector<32x128xbf16>, vector<16x128xf32> -> vector<16x128xf32>
    %c0_4 = arith.constant 0 : index
    %c0_5 = arith.constant 0 : index
    %7 = vector.load %arg4[%c0_4, %c0_5] : memref<1x128xf32, #tpu.memory_space<vmem>>, vector<1x128xf32>
    %8 = vector.broadcast %7 : vector<1x128xf32> to vector<16x128xf32>
    %9 = arith.addf %6, %8 : vector<16x128xf32>
    %c0_6 = arith.constant 0 : index
    %c0_7 = arith.constant 0 : index
    %10 = vector.load %arg6[%c0_6, %c0_7] : memref<16x1xf32, #tpu.memory_space<vmem>>, vector<16x1xf32>
    %cst_8 = arith.constant dense<0xFF800000> : vector<16xf32>
    %11 = vector.multi_reduction <maximumf>, %9, %cst_8 [1] : vector<16x128xf32> to vector<16xf32>
    %12 = vector.shape_cast %11 : vector<16xf32> to vector<16x1xf32>
    %13 = arith.maximumf %10, %12 : vector<16x1xf32>
    %c0_9 = arith.constant 0 : index
    %c0_10 = arith.constant 0 : index
    %14 = vector.load %arg7[%c0_9, %c0_10] : memref<16x1xf32, #tpu.memory_space<vmem>>, vector<16x1xf32>
    %15 = arith.subf %10, %13 : vector<16x1xf32>
    %16 = math.exp %15 : vector<16x1xf32>
    %17 = arith.mulf %14, %16 : vector<16x1xf32>
    %18 = vector.broadcast %13 : vector<16x1xf32> to vector<16x128xf32>
    %19 = arith.subf %9, %18 : vector<16x128xf32>
    %20 = math.exp %19 : vector<16x128xf32>
    %cst_11 = arith.constant dense<0.000000e+00> : vector<16xf32>
    %21 = vector.multi_reduction <add>, %20, %cst_11 [1] : vector<16x128xf32> to vector<16xf32>
    %22 = vector.shape_cast %21 : vector<16xf32> to vector<16x1xf32>
    %23 = arith.addf %17, %22 : vector<16x1xf32>
    %c0_12 = arith.constant 0 : index
    %c0_13 = arith.constant 0 : index
    %24 = vector.load %arg7[%c0_12, %c0_13] : memref<16x1xf32, #tpu.memory_space<vmem>>, vector<16x1xf32>
    tpu.vector_store %arg7[%c0_12, %c0_13], %23 {strides = array<i32>} : memref<16x1xf32, #tpu.memory_space<vmem>>, vector<16x1xf32>,
    %c0_14 = arith.constant 0 : index
    %c0_15 = arith.constant 0 : index
    %25 = vector.load %arg6[%c0_14, %c0_15] : memref<16x1xf32, #tpu.memory_space<vmem>>, vector<16x1xf32>
    tpu.vector_store %arg6[%c0_14, %c0_15], %13 {strides = array<i32>} : memref<16x1xf32, #tpu.memory_space<vmem>>, vector<16x1xf32>,
    %c128_i32 = arith.constant 128 : i32
    %26 = arith.muli %arg1, %c128_i32 : i32
    %27 = tpu.assume_multiple %26, 128 : i32
    %c0_16 = arith.constant 0 : index
    %28 = arith.index_cast %27 : i32 to index
    %29 = vector.load %arg5[%c0_16, %28] : memref<16x128xf32, #tpu.memory_space<vmem>>, vector<16x128xf32>
    tpu.vector_store %arg5[%c0_16, %28], %9 {strides = array<i32>} : memref<16x128xf32, #tpu.memory_space<vmem>>, vector<16x128xf32>,
    %c0_i32_17 = arith.constant 0 : i32
    %30 = arith.cmpi eq, %arg1, %c0_i32_17 : i32
    %31 = arith.extui %30 : i1 to i32
    %c0_i32_18 = arith.constant 0 : i32
    %32 = arith.cmpi ne, %31, %c0_i32_18 : i32
    scf.if %32 {
      %c0_19 = arith.constant 0 : index
      %c0_20 = arith.constant 0 : index
      %33 = vector.load %arg6[%c0_19, %c0_20] : memref<16x1xf32, #tpu.memory_space<vmem>>, vector<16x1xf32>
      %c0_21 = arith.constant 0 : index
      %c0_22 = arith.constant 0 : index
      %34 = vector.load %arg7[%c0_21, %c0_22] : memref<16x1xf32, #tpu.memory_space<vmem>>, vector<16x1xf32>
      %35 = math.log %34 : vector<16x1xf32>
      %36 = arith.addf %33, %35 : vector<16x1xf32>
      %c0_23 = arith.constant 0 : index
      %c0_24 = arith.constant 0 : index
      %37 = vector.load %arg5[%c0_23, %c0_24] : memref<16x128xf32, #tpu.memory_space<vmem>>, vector<16x128xf32>
      %38 = vector.broadcast %36 : vector<16x1xf32> to vector<16x128xf32>
      %39 = arith.subf %37, %38 : vector<16x128xf32>
      %c0_25 = arith.constant 0 : index
      %c0_26 = arith.constant 0 : index
      %40 = vector.load %arg5[%c0_25, %c0_26] : memref<16x128xf32, #tpu.memory_space<vmem>>, vector<16x128xf32>
      tpu.vector_store %arg5[%c0_25, %c0_26], %39 {strides = array<i32>} : memref<16x128xf32, #tpu.memory_space<vmem>>, vector<16x128xf32>,
    } else {
    }
    return
  }
  func.func @transform_0(%arg0: i32, %arg1: i32) -> (i32, i32) {
    %c0_i32 = arith.constant 0 : i32
    %c0_i32_0 = arith.constant 0 : i32
    return %arg0, %c0_i32 : i32, i32
  }
  func.func @transform_1(%arg0: i32, %arg1: i32) -> (i32, i32) {
    %c0_i32 = arith.constant 0 : i32
    %c0_i32_0 = arith.constant 0 : i32
    return %c0_i32, %arg1 : i32, i32
  }
  func.func @transform_2(%arg0: i32, %arg1: i32) -> (i32, i32) {
    %c0_i32 = arith.constant 0 : i32
    %c0_i32_0 = arith.constant 0 : i32
    return %c0_i32, %arg1 : i32, i32
  }
  func.func @transform_3(%arg0: i32, %arg1: i32) -> (i32, i32) {
    %c0_i32 = arith.constant 0 : i32
    %c0_i32_0 = arith.constant 0 : i32
    return %arg0, %c0_i32 : i32, i32
  }
}

</mosaic_0001>

<llo_original>
// kernel: tpu_custom_call.1
$region0: #{tpu_custom_call.1}
  #allocation0 [shape = 'u32[]', space=smem, size = 0x4, offset = 0x4, fixed_abs, tag = 'smem constant byte address 0x4 - core index']
  #allocation1 [shape = 'u32[72,128]{1,0:T(1,128)}', space=vmem, size = 0x9000, scoped, tag = 'internal scratch']
  #allocation2 [shape = 'f32[16,1]{1,0:T(8,128)}', space=vmem, size = 0x2000, scoped, tag = 'scratch operand']
  #allocation3 [shape = 'f32[16,1]{1,0:T(8,128)}', space=vmem, size = 0x2000, scoped, tag = 'scratch operand']
  %s0 = inlined_call_operand.hbm [shape: f32[16,32], index: 0, kind: input, shape index: {}]
  %s1 = inlined_call_operand.hbm [shape: bf16[32,128], index: 1, kind: input, shape index: {}]
  %s2 = inlined_call_operand.vmem [shape: f32[1,128], index: 2, kind: input, shape index: {}]
  %s3 = inlined_call_operand.hbm [shape: f32[16,128], index: 3, kind: output, shape index: {}]
  %s4 = sld [smem:[#allocation0]]
  $region38: #{tpu_custom_call.1} parent=0
    _
  %s6 = ssub.s32 1, %s4
  %s7 = scalar_select 0, %s6, %s4
  $region1: #{tpu_custom_call.1} parent=0
    #allocation4 [shape = 'u8[8192]{0}', space=vmem, size = 0x2000, scoped, tag = 'input window, operand 0, single buffered']
    #allocation5 [shape = 's32[1]{0}', space=sflag, size = 0x4, scoped, tag = 'scoped memory for tpu_custom_call.1']
    #allocation6 [shape = 's32[1]{0}', space=sflag, size = 0x4, scoped, tag = 'scoped memory for tpu_custom_call.1']
    #allocation7 [shape = 'u8[8192]{0}', space=vmem, size = 0x2000, scoped, tag = 'input window, operand 1, single buffered']
    #allocation8 [shape = 's32[1]{0}', space=sflag, size = 0x4, scoped, tag = 'scoped memory for tpu_custom_call.1']
    #allocation9 [shape = 'u8[8192]{0}', space=vmem, size = 0x2000, scoped, tag = 'output window, operand 0, single buffered']
    %8 = vsyncpa [#allocation5], 0
    %9 = vsyncpa [#allocation8], 0
    %10 = vsyncpa [#allocation6], 0
    // Predicated region
    $region2: #{tpu_custom_call.1} parent=1 // pred_check
      _
    $region3: #{tpu_custom_call.1} parent=1 // pred_check_branch
      %12 = sbr.rel (0) target = $region5
    $region4: #{tpu_custom_call.1} parent=1 // pred_region
      %14 = vsyncadd [#allocation5], 0
      %s15 = sshll.u32 %s0, 4
      %s16 = int_to_ptr.hbm [resolvable:$true] %s15
      %s17 = sshll.u32 [#allocation4], 4
      %s18 = int_to_ptr.vmem [resolvable:$true] %s17
      %23 = dma.hbm_to_vmem [thread:$0]  %s16, 256, %s18, [#allocation5], 128, 128, 8
    $region5: #{tpu_custom_call.1} parent=1 // pred_fallthru
      _
    // Predicated region
    $region6: #{tpu_custom_call.1} parent=1 // pred_check
      _
    $region7: #{tpu_custom_call.1} parent=1 // pred_check_branch
      %25 = sbr.rel (0) target = $region9
    $region8: #{tpu_custom_call.1} parent=1 // pred_region
      %27 = vsyncadd [#allocation8], 0
      %s28 = sshll.u32 %s1, 4
      %s29 = int_to_ptr.hbm [resolvable:$true] %s28
      %s30 = sshll.u32 [#allocation7], 4
      %s31 = int_to_ptr.vmem [resolvable:$true] %s30
      %36 = dma.hbm_to_vmem [thread:$0]  %s29, 256, %s31, [#allocation8], 64, 64, 4
    $region9: #{tpu_custom_call.1} parent=1 // pred_fallthru
      _
    // Predicated region
    $region10: #{tpu_custom_call.1} parent=1 // pred_check
      _
    $region11: #{tpu_custom_call.1} parent=1 // pred_check_branch
      %38 = sbr.rel (0) target = $region13
    $region12: #{tpu_custom_call.1} parent=1 // pred_region
      _
    $region13: #{tpu_custom_call.1} parent=1 // pred_fallthru
      _
    // Predicated region
    $region14: #{tpu_custom_call.1} parent=1 // pred_check
      _
    $region15: #{tpu_custom_call.1} parent=1 // pred_check_branch
      %40 = sbr.rel (0) target = $region17
    $region16: #{tpu_custom_call.1} parent=1 // pred_region
      %42 = dma.done [#allocation5], 256
    $region17: #{tpu_custom_call.1} parent=1 // pred_fallthru
      _
    // Predicated region
    $region18: #{tpu_custom_call.1} parent=1 // pred_check
      _
    $region19: #{tpu_custom_call.1} parent=1 // pred_check_branch
      %44 = sbr.rel (0) target = $region21
    $region20: #{tpu_custom_call.1} parent=1 // pred_region
      %46 = dma.done [#allocation8], 256
    $region21: #{tpu_custom_call.1} parent=1 // pred_fallthru
      _
    %p48 = scmp.eq.s32.totalorder 0, 0
    // Predicated region
    $region22: #{tpu_custom_call.1} parent=1 // pred_check
      %p49 = pneg %p48
    $region23: #{tpu_custom_call.1} parent=1 // pred_check_branch
      %51 = sbr.rel (%p49) target = $region25
    $region24: #{tpu_custom_call.1} parent=1 // pred_region
      %vm52 = vcmask 7168
      %53 = vst.msk [vmem:[#allocation2] sm:$0xff] %vm52, -inf
      %54 = vst.msk [vmem:[#allocation2 + $0x8] sm:$0xff] %vm52, -inf
      %55 = vst.msk [vmem:[#allocation3] sm:$0xff] %vm52, 0.0
      %56 = vst.msk [vmem:[#allocation3 + $0x8] sm:$0xff] %vm52, 0.0
    $region25: #{tpu_custom_call.1} parent=1 // pred_fallthru
      _
    %v57 = vld [vmem:[#allocation4] sm:$0xff]
    %v58 = vld [vmem:[#allocation4 + $0x8] sm:$0xff]
    %v59 = vpack.c.bf16 %v58, %v57
    %v60 = vld [vmem:[#allocation7] sm:$0xf]
    %v61 = vld [vmem:[#allocation7 + $0x4] sm:$0xf]
    %v62 = vld [vmem:[#allocation7 + $0x8] sm:$0xf]
    %v63 = vld [vmem:[#allocation7 + $0xc] sm:$0xf]
    %v64 = vld [vmem:[%s2] sm:$0x1]
    %v66 = vperm.slane %v64, 0
    %v72 = vunpack.c.l.b16 %v60
    %v73 = vunpack.c.l.b16 %v61
    %v74 = vunpack.c.l.b16 %v62
    %v75 = vunpack.c.l.b16 %v63
    %v76 = vpack.c.b16 %v73, %v72
    %v77 = vpack.c.b16 %v75, %v74
    %vm80 = vcmask 261120
    %v82 = vsel %vm80, %v59, 0
    %84 = vmatpush.bf16.msra.mxu0 0
    %85 = vmatpush.bf16.msra.mxu0 0
    %86 = vmatpush.bf16.msra.mxu0 0
    %87 = vmatpush.bf16.msra.mxu0 0
    %88 = vmatpush.bf16.msra.mxu0 0
    %89 = vmatpush.bf16.msra.mxu0 0
    %90 = vmatpush.bf16.msra.mxu0 %v77
    %91 = vmatpush.bf16.msra.mxu0 %v76
    %92 = vmatmul.bf16.gmra.mxu0 %v82
    %v93 = vpop.f32.mrf.mxu0
    %v94 = vadd.f32 %v66, %v93
    %v95 = vpop.f32.mrf.mxu0
    %v96 = vadd.f32 %v66, %v95
    %97 = vdwg.mxu0
    %v98 = vld [vmem:[#allocation2] sm:$0xff]
    %v99 = vld [vmem:[#allocation2 + $0x8] sm:$0xff]
    %100 = vmax.xlane.f32.xlu0 %v94
    %v101 = vpop.xlane.xlu0 %100
    %102 = vmax.xlane.f32.xlu0 %v96
    %v103 = vpop.xlane.xlu0 %102
    %v104 = vmax.f32 %v98, %v101
    %v105 = vmax.f32 %v99, %v103
    %v106 = vld [vmem:[#allocation3] sm:$0xff]
    %v107 = vld [vmem:[#allocation3 + $0x8] sm:$0xff]
    %v108 = vsub.f32 %v98, %v104
    %v109 = vsub.f32 %v99, %v105
    %v110 = vmul.f32 %v108, 1.442695
    %v111 = vpow.pop %v110
    %v112 = vmul.f32 %v109, 1.442695
    %v113 = vpow.pop %v112
    %v114 = vmul.f32 %v106, %v111
    %v115 = vmul.f32 %v107, %v113
    %117 = vset.pattern.permute.xlu0 0
    %118 = vperm.xlu0 %117, %v104
    %v119 = vpop.permute.xlu0 %118
    %122 = vset.pattern.permute.xlu0 0
    %123 = vperm.xlu0 %122, %v105
    %v124 = vpop.permute.xlu0 %123
    %v126 = vsub.f32 %v94, %v119
    %v127 = vsub.f32 %v96, %v124
    %v128 = vmul.f32 %v126, 1.442695
    %v129 = vpow.pop %v128
    %v130 = vmul.f32 %v127, 1.442695
    %v131 = vpow.pop %v130
    %132 = vadd.xlane.f32.xlu0 %v129
    %v133 = vpop.xlane.xlu0 %132
    %134 = vadd.xlane.f32.xlu0 %v131
    %v135 = vpop.xlane.xlu0 %134
    %v136 = vadd.f32 %v114, %v133
    %v137 = vadd.f32 %v115, %v135
    %vm138 = vcmask 7168
    %139 = vst.msk [vmem:[#allocation3] sm:$0xff] %vm138, %v136
    %140 = vst.msk [vmem:[#allocation3 + $0x8] sm:$0xff] %vm138, %v137
    %141 = vst.msk [vmem:[#allocation2] sm:$0xff] %vm138, %v104
    %142 = vst.msk [vmem:[#allocation2 + $0x8] sm:$0xff] %vm138, %v105
    %s143 = smul.u32 0, 128
    %s144 = sshra.s32 %s143, 7
    %s145 = sand.u32 %s143, 127
    %s146 = scalar_lea.vmem [#allocation9], %s144
    %147 = vst [vmem:[%s146] sm:$0xff] %v94
    %148 = vst [vmem:[%s146 + $0x8] sm:$0xff] %v96
    // Predicated region
    $region26: #{tpu_custom_call.1} parent=1 // pred_check
      %p149 = pneg %p48
    $region27: #{tpu_custom_call.1} parent=1 // pred_check_branch
      %151 = sbr.rel (%p149) target = $region29
    $region28: #{tpu_custom_call.1} parent=1 // pred_region
      %v152 = vld [vmem:[#allocation2] sm:$0xff]
      %v153 = vld [vmem:[#allocation2 + $0x8] sm:$0xff]
      %v154 = vld [vmem:[#allocation3] sm:$0xff]
      %v155 = vld [vmem:[#allocation3 + $0x8] sm:$0xff]
      %v156 = vlog2.pop %v154
      %v157 = vmul.f32 %v156, 0.6931472
      %v158 = vlog2.pop %v155
      %v159 = vmul.f32 %v158, 0.6931472
      %v160 = vadd.f32 %v152, %v157
      %v161 = vadd.f32 %v153, %v159
      %v162 = vld [vmem:[#allocation9] sm:$0xff]
      %v163 = vld [vmem:[#allocation9 + $0x8] sm:$0xff]
      %165 = vset.pattern.permute.xlu0 0
      %166 = vperm.xlu0 %165, %v160
      %v167 = vpop.permute.xlu0 %166
      %170 = vset.pattern.permute.xlu0 0
      %171 = vperm.xlu0 %170, %v161
      %v172 = vpop.permute.xlu0 %171
      %v174 = vsub.f32 %v162, %v167
      %v175 = vsub.f32 %v163, %v172
      %176 = vst [vmem:[#allocation9] sm:$0xff] %v174
      %177 = vst [vmem:[#allocation9 + $0x8] sm:$0xff] %v175
    $region29: #{tpu_custom_call.1} parent=1 // pred_fallthru
      _
    // Predicated region
    $region30: #{tpu_custom_call.1} parent=1 // pred_check
      _
    $region31: #{tpu_custom_call.1} parent=1 // pred_check_branch
      %179 = sbr.rel (0) target = $region33
    $region32: #{tpu_custom_call.1} parent=1 // pred_region
      %181 = vsyncadd [#allocation6], 0
      %s182 = sshll.u32 [#allocation9], 4
      %s183 = int_to_ptr.vmem [resolvable:$true] %s182
      %s184 = sshll.u32 %s3, 4
      %s185 = int_to_ptr.hbm [resolvable:$true] %s184
      %190 = dma.vmem_to_hbm [thread:$0]  %s183, 256, %s185, [#allocation6], 128, 128, 8
    $region33: #{tpu_custom_call.1} parent=1 // pred_fallthru
      _
    // Predicated region
    $region34: #{tpu_custom_call.1} parent=1 // pred_check
      _
    $region35: #{tpu_custom_call.1} parent=1 // pred_check_branch
      %192 = sbr.rel (0) target = $region37
    $region36: #{tpu_custom_call.1} parent=1 // pred_region
      %194 = dma.done [#allocation6], 256
    $region37: #{tpu_custom_call.1} parent=1 // pred_fallthru
      _
    %195 = vsyncpa [#allocation5], 1
    %196 = vsyncpa [#allocation8], 1
    %197 = vsyncpa [#allocation6], 1

</llo_original>
